<compile_context>
chip_gen: v7x
topology: tpu7x:2x2x1
jax: 0.10.0
libtpu: 0.0.40
codegen_flags: <defaults>
</compile_context>

<pallas_src>
import functools

import jax
import jax.numpy as jnp
from jax.experimental import pallas as pl
from jax.experimental.pallas import tpu as pltpu


_LANES = 128
_DEFAULT_TILE_ROWS = 4096      # 4096 rows * 128 lanes * 4 B = 2 MiB of f32 logits per step
_MIN_TILE_ROWS = 2048          # keep >= ~1 MiB of logits per step (85%+ of HBM roofline)
_ROW_PACK = 32                 # int8 blocks want a second-minor multiple of 32
_VMEM_BUDGET = 8 * 1024 * 1024 # double-buffered per-step bytes; safe under v5e's 16 MiB default
_DEFAULT_TILE_N = 65536        # fallback (transposed) path: samples per grid step


def _round_up(x, m):
    return ((x + m - 1) // m) * m


# ---------------------------------------------------------------------------
# Fast path: class count divides 128 -> class-fast interleaved lanes, no
# transpose / no extra HBM pass over the logits.
# ---------------------------------------------------------------------------
def _group_allreduce(v, lane, width, combine):
    """All-reduce within aligned groups of `width` adjacent lanes (width | 128,
    power of two).  Every lane ends up holding the reduction over its group.

    Uses a lane butterfly: partner(l) = l ^ shift.  Assumes pltpu.roll follows
    jnp.roll semantics (positive shift moves elements toward higher indices);
    rolls are expressed with positive amounts (128 - shift == roll by -shift).
    Wrap-around values are never selected because groups are aligned.
    """
    shift = 1
    while shift < width:
        fwd = pltpu.roll(v, _LANES - shift, axis=1)   # lane l <- v[l + shift]
        bwd = pltpu.roll(v, shift, axis=1)            # lane l <- v[l - shift]
        partner = jnp.where((lane & shift) == 0, fwd, bwd)
        v = combine(v, partner)
        shift *= 2
    return v


def _focal_loss_interleaved_kernel(x_ref, t_ref, alpha_ref, out_ref, *,
                                   num_classes, gamma, valid_rows, tile_rows):
    i = pl.program_id(0)

    x = x_ref[...].astype(jnp.float32)           # (R, 128): lane l -> sample l//C, class l%C
    t = t_ref[...].astype(jnp.int32)             # (R, 128): target id per lane (-1 = padding)
    alpha = alpha_ref[...].astype(jnp.float32)   # (1, 128): alpha[l % C]

    rows = x.shape[0]
    lane = jax.lax.broadcasted_iota(jnp.int32, (1, _LANES), 1)
    cls = jnp.bitwise_and(lane, num_classes - 1)          # lane % C (C is a power of two)
    is_target = (t == cls)                                 # one-hot inside each C-lane group

    # Per-sample max / sum-exp, broadcast over the C lanes of each group.
    m = _group_allreduce(x, lane, num_classes, jnp.maximum)
    e = jnp.exp(x - m)
    denom = _group_allreduce(e, lane, num_classes, jnp.add)

    # Per-lane values; only the target lane of each sample survives the mask.
    ce = jnp.log(denom) - (x - m)                 # = logsumexp(logits) - logit
    pt = e / denom                                # = exp(-ce) at the target lane (reuses e)
    # TODO(synk): pl.reciprocal(denom, approx=True) would shave an EUP op on
    # v7x at a small accuracy cost; kept exact to preserve tight tolerances.
    one_minus_pt = jnp.maximum(1.0 - pt, 0.0)     # clamp rounding noise; keeps pow() NaN-free

    g = float(gamma)
    if g.is_integer() and g >= 0:                 # integer gamma -> VPU multiplies, no EUP pow
        w = jnp.ones_like(one_minus_pt)
        for _ in range(int(g)):
            w = w * one_minus_pt
    else:
        w = one_minus_pt ** g

    contrib = alpha * w * ce

    # Keep only target lanes of rows holding real samples (the final grid step
    # may see a partial / out-of-bounds block whose rows contain garbage).
    row = i * tile_rows + jax.lax.broadcasted_iota(jnp.int32, (rows, 1), 0)
    keep = jnp.logical_and(is_target, row < valid_rows)
    partial = jnp.sum(jnp.where(keep, contrib, 0.0))

    # Lane-dense (1, 1, 128) store of the per-tile partial sum (unmasked vst).
    out_ref[...] = jnp.broadcast_to(partial, out_ref.shape).astype(out_ref.dtype)


def _choose_tile_rows(rows, requested, itemsize):
    # VMEM cap: double-buffered (logits + int8 targets) blocks stay under the
    # budget with headroom for kernel temporaries on every TPU generation.
    cap = _VMEM_BUDGET // (2 * _LANES * (itemsize + 1))
    cap = max(_ROW_PACK, (cap // _ROW_PACK) * _ROW_PACK)
    if requested is None:
        tr = min(_DEFAULT_TILE_ROWS, cap)
        # Prefer >= 4 grid steps (feeds both v7x TensorCores) as long as the
        # per-step DMA stays >= ~1 MiB.
        split4 = _round_up(pl.cdiv(rows, 4), _ROW_PACK)
        tr = min(tr, max(_MIN_TILE_ROWS, split4))
    else:
        tr = max(1, min(int(requested), cap))
    if tr >= rows:
        return rows                                  # single block spanning the whole array
    tr = _round_up(tr, _ROW_PACK)
    return rows if tr >= rows else tr


def _focal_loss_interleaved(logits, targets, alpha, gamma, tile_rows):
    n, c = logits.shape
    spr = _LANES // c                                # samples per 128-lane row
    total = n * c
    rows = pl.cdiv(total, _LANES)
    pad = rows * _LANES - total

    flat = logits.reshape(total)                     # free row-major view, keeps native dtype
    if pad:
        flat = jnp.pad(flat, (0, pad))               # copies only when N % (128/C) != 0
    x2d = flat.reshape(rows, _LANES)

    t8 = jnp.repeat(targets.astype(jnp.int8), c)     # class-fast repeat: 1 byte per lane
    if pad:
        t8 = jnp.pad(t8, (0, pad), constant_values=-1)  # -1 never matches a class id
    t2d = t8.reshape(rows, _LANES)

    alpha_lanes = jnp.tile(alpha.astype(jnp.float32).reshape(c), spr).reshape(1, _LANES)

    itemsize = jnp.dtype(logits.dtype).itemsize
    tr = _choose_tile_rows(rows, tile_rows, itemsize)
    num_tiles = pl.cdiv(rows, tr)

    kernel = functools.partial(
        _focal_loss_interleaved_kernel, num_classes=c, gamma=gamma,
        valid_rows=rows, tile_rows=tr)

    cost = pl.CostEstimate(
        flops=32 * total,
        transcendentals=3 * total,
        bytes_accessed=total * (itemsize + 1) + num_tiles * _LANES * 4 + _LANES * 4,
    )

    partials = pl.pallas_call(
        kernel,
        out_shape=jax.ShapeDtypeStruct((num_tiles, 1, _LANES), jnp.float32),
        grid=(num_tiles,),
        in_specs=[
            pl.BlockSpec((tr, _LANES), lambda i: (i, 0)),     # logits rows
            pl.BlockSpec((tr, _LANES), lambda i: (i, 0)),     # repeated int8 targets
            pl.BlockSpec((1, _LANES), lambda i: (0, 0)),      # alpha[lane % C] (resident)
        ],
        out_specs=pl.BlockSpec((1, 1, _LANES), lambda i: (i, 0, 0)),
        compiler_params=pltpu.CompilerParams(dimension_semantics=("parallel",)),
        cost_estimate=cost,
    )(x2d, t2d, alpha_lanes)

    return jnp.sum(partials[:, 0, 0]) * jnp.float32(1.0 / n)


# ---------------------------------------------------------------------------
# Fallback path (any class count): lane-dense (C, N) transposed layout.  Pays
# one extra HBM pass for the transpose, so it is only used when C does not
# divide 128.
# ---------------------------------------------------------------------------
def _focal_loss_transposed_kernel(logits_ref, targets_ref, alpha_ref, out_ref, *,
                                  gamma, n_valid, tile_n):
    i = pl.program_id(0)

    logits = logits_ref[...].astype(jnp.float32)   # (C, T), classes on sublanes
    targets = targets_ref[...]                     # (1, T), int32
    alpha = alpha_ref[...].astype(jnp.float32)     # (C, 1)

    c, t = logits.shape
    class_ids = jax.lax.broadcasted_iota(jnp.int32, (c, t), 0)
    one_hot = (class_ids == targets).astype(jnp.float32)

    row_max = jnp.max(logits, axis=0, keepdims=True)
    lse = row_max + jnp.log(
        jnp.sum(jnp.exp(logits - row_max), axis=0, keepdims=True))
    tgt_logit = jnp.sum(logits * one_hot, axis=0, keepdims=True)
    ce = lse - tgt_logit

    pt = jnp.exp(-ce)
    one_minus_pt = jnp.maximum(1.0 - pt, 0.0)

    g = float(gamma)
    if g.is_integer() and g >= 0:
        focal_w = jnp.ones_like(one_minus_pt)
        for _ in range(int(g)):
            focal_w = focal_w * one_minus_pt
    else:
        focal_w = one_minus_pt ** g

    alpha_t = jnp.sum(alpha * one_hot, axis=0, keepdims=True)

    sample_ids = i * tile_n + jax.lax.broadcasted_iota(jnp.int32, (1, t), 1)
    focal = jnp.where(sample_ids < n_valid, alpha_t * focal_w * ce, 0.0)

    partial = jnp.sum(focal)
    out_ref[...] = jnp.broadcast_to(partial, out_ref.shape).astype(out_ref.dtype)


def _focal_loss_transposed(logits, targets, alpha, gamma, tile_n):
    n, c = logits.shape

    # Cap the tile so double-buffered (C-padded) blocks stay inside the VMEM budget.
    bytes_per_col = 2 * 4 * (_round_up(c, 8) + 8)
    vmem_cap = max(_LANES, ((_VMEM_BUDGET // bytes_per_col) // _LANES) * _LANES)

    tile = min(int(tile_n), vmem_cap)
    tile = min(tile, _round_up(pl.cdiv(n, 2), _LANES))   # >= 2 steps feeds both v7x cores
    tile = min(tile, _round_up(n, _LANES))
    tile = max(_LANES, _round_up(tile, _LANES))
    n_pad = _round_up(n, tile)
    num_tiles = n_pad // tile

    logits_t = jnp.pad(jnp.transpose(logits), ((0, 0), (0, n_pad - n)))
    targets_row = jnp.pad(targets.astype(jnp.int32),
                          (0, n_pad - n)).reshape(1, n_pad)
    alpha_col = alpha.astype(jnp.float32).reshape(c, 1)

    kernel = functools.partial(_focal_loss_transposed_kernel, gamma=gamma,
                               n_valid=n, tile_n=tile)

    partials = pl.pallas_call(
        kernel,
        out_shape=jax.ShapeDtypeStruct((num_tiles, 1, _LANES), jnp.float32),
        grid=(num_tiles,),
        in_specs=[
            pl.BlockSpec((c, tile), lambda i: (0, i)),
            pl.BlockSpec((1, tile), lambda i: (0, i)),
            pl.BlockSpec((c, 1), lambda i: (0, 0)),
        ],
        out_specs=pl.BlockSpec((1, 1, _LANES), lambda i: (i, 0, 0)),
        compiler_params=pltpu.CompilerParams(dimension_semantics=("parallel",)),
    )(logits_t, targets_row, alpha_col)

    return jnp.sum(partials[:, 0, 0]) * jnp.float32(1.0 / n)


# ---------------------------------------------------------------------------
# Public entry point.
# ---------------------------------------------------------------------------
def focal_loss(logits, targets, alpha, gamma=2, tile_rows=None, tile_n=None):
    """logits: (N, C) (f32 or bf16); targets: (N,) int; alpha: (C,). Returns f32 loss."""
    n, c = logits.shape
    if _LANES % c == 0:
        return _focal_loss_interleaved(logits, targets, alpha, gamma, tile_rows)
    # Class counts that do not divide 128 fall back to the transposed layout.
    return _focal_loss_transposed(logits, targets, alpha, gamma,
                                  tile_n if tile_n is not None else _DEFAULT_TILE_N)


def _reference_focal_loss(logits, targets, alpha, gamma=2):
    logits = logits.astype(jnp.float32)
    lse = jax.nn.logsumexp(logits, axis=-1)
    ce = lse - jnp.take_along_axis(logits, targets[:, None], axis=-1)[:, 0]
    pt = jnp.exp(-ce)
    return jnp.mean(alpha.astype(jnp.float32)[targets] * (1.0 - pt) ** gamma * ce)


if __name__ == "__main__":
    key = jax.random.PRNGKey(0)
    keys = jax.random.split(key, 8)
    gamma = 2

    # Case 1: tiny batch over 4 ship classes (single tile, padded partial row).
    n1, c1 = 8, 4
    logits1 = jax.random.normal(keys[0], (n1, c1), dtype=jnp.float32)
    targets1 = jax.random.randint(keys[1], (n1,), 0, c1, dtype=jnp.int32)
    alpha1 = jnp.linspace(0.25, 1.0, c1, dtype=jnp.float32)
    out1 = jax.block_until_ready(focal_loss(logits1, targets1, alpha1, gamma))
    ref1 = _reference_focal_loss(logits1, targets1, alpha1, gamma)
    assert jnp.allclose(out1, ref1, atol=1e-5, rtol=1e-5), (out1, ref1)

    # Case 2: misaligned N exercises the in-row padding path.
    n2 = 300
    logits2 = jax.random.normal(keys[2], (n2, c1), dtype=jnp.float32) * 3.0
    targets2 = jax.random.randint(keys[3], (n2,), 0, c1, dtype=jnp.int32)
    out2 = jax.block_until_ready(focal_loss(logits2, targets2, alpha1, gamma))
    ref2 = _reference_focal_loss(logits2, targets2, alpha1, gamma)
    assert jnp.allclose(out2, ref2, atol=1e-5, rtol=1e-4), (out2, ref2)

    # Case 3: bf16 logits, aligned N (zero-copy layout), multi-tile grid.
    # (tile_rows=32 only to exercise the grid at a small test size; the
    #  production default is 4096 rows per step.)
    n3 = 2048
    logits3 = (jax.random.normal(keys[4], (n3, c1)) * 2.0).astype(jnp.bfloat16)
    targets3 = jax.random.randint(keys[5], (n3,), 0, c1, dtype=jnp.int32)
    out3 = jax.block_until_ready(
        focal_loss(logits3, targets3, alpha1, gamma, tile_rows=32))
    ref3 = _reference_focal_loss(logits3, targets3, alpha1, gamma)
    assert jnp.allclose(out3, ref3, atol=1e-4, rtol=1e-3), (out3, ref3)

    # Case 4: class count that does not divide 128 -> transposed fallback path.
    n4, c4 = 64, 5
    logits4 = jax.random.normal(keys[6], (n4, c4), dtype=jnp.float32)
    targets4 = jax.random.randint(keys[7], (n4,), 0, c4, dtype=jnp.int32)
    alpha4 = jnp.linspace(0.2, 1.0, c4, dtype=jnp.float32)
    out4 = jax.block_until_ready(focal_loss(logits4, targets4, alpha4, gamma))
    ref4 = _reference_focal_loss(logits4, targets4, alpha4, gamma)
    assert jnp.allclose(out4, ref4, atol=1e-5, rtol=1e-4), (out4, ref4)

    print("KERNEL_OK")
</pallas_src>

<mosaic_0001>
module attributes {stable_mosaic.version = 11 : i64} {
  func.func @_focal_loss_interleaved_kernel(%arg0: i32, %arg1: memref<1x128xf32, #tpu.memory_space<vmem>>, %arg2: memref<1x128xi8, #tpu.memory_space<vmem>>, %arg3: memref<1x128xf32, #tpu.memory_space<vmem>>, %arg4: memref<1x1x128xf32, #tpu.memory_space<vmem>>) attributes {dimension_semantics = [#tpu.dimension_semantics<parallel>], iteration_bounds = array<i64: 1>, scalar_prefetch = 0 : i64, scratch_operands = 0 : i64, tpu.core_type = #tpu.core_type<tc>, window_params = [{transform_indices = @transform_0, window_bounds = array<i64: 1, 128>}, {transform_indices = @transform_1, window_bounds = array<i64: 1, 128>}, {pipeline_mode = #tpu.pipeline_mode<synchronous>, transform_indices = @transform_2, window_bounds = array<i64: 1, 128>}, {transform_indices = @transform_3, window_bounds = array<i64: 1, 1, 128>}]} {
    %c0 = arith.constant 0 : index
    %c0_0 = arith.constant 0 : index
    %0 = vector.load %arg1[%c0, %c0_0] : memref<1x128xf32, #tpu.memory_space<vmem>>, vector<1x128xf32>
    %c0_1 = arith.constant 0 : index
    %c0_2 = arith.constant 0 : index
    %1 = vector.load %arg2[%c0_1, %c0_2] : memref<1x128xi8, #tpu.memory_space<vmem>>, vector<1x128xi8>
    %2 = arith.extsi %1 : vector<1x128xi8> to vector<1x128xi32>
    %c0_3 = arith.constant 0 : index
    %c0_4 = arith.constant 0 : index
    %3 = vector.load %arg3[%c0_3, %c0_4] : memref<1x128xf32, #tpu.memory_space<vmem>>, vector<1x128xf32>
    %4 = tpu.iota {dimensions = array<i32: 1>} : vector<1x128xi32>
    %c3_i32 = arith.constant 3 : i32
    %5 = vector.broadcast %c3_i32 : i32 to vector<1x128xi32>
    %6 = arith.andi %4, %5 : vector<1x128xi32>
    %7 = arith.cmpi eq, %2, %6 : vector<1x128xi32>
    %c127_i32 = arith.constant 127 : i32
    %8 = tpu.dynamic_rotate %0 by %c127_i32 dim 1 : vector<1x128xf32>, i32 -> vector<1x128xf32>
    %c1_i32 = arith.constant 1 : i32
    %9 = tpu.dynamic_rotate %0 by %c1_i32 dim 1 : vector<1x128xf32>, i32 -> vector<1x128xf32>
    %c1_i32_5 = arith.constant 1 : i32
    %10 = vector.broadcast %c1_i32_5 : i32 to vector<1x128xi32>
    %11 = arith.andi %4, %10 : vector<1x128xi32>
    %c0_i32 = arith.constant 0 : i32
    %12 = vector.broadcast %c0_i32 : i32 to vector<1x128xi32>
    %13 = arith.cmpi eq, %11, %12 : vector<1x128xi32>
    %14 = arith.select %13, %8, %9 : vector<1x128xi1>, vector<1x128xf32>
    %15 = arith.maximumf %0, %14 : vector<1x128xf32>
    %c126_i32 = arith.constant 126 : i32
    %16 = tpu.dynamic_rotate %15 by %c126_i32 dim 1 : vector<1x128xf32>, i32 -> vector<1x128xf32>
    %c2_i32 = arith.constant 2 : i32
    %17 = tpu.dynamic_rotate %15 by %c2_i32 dim 1 : vector<1x128xf32>, i32 -> vector<1x128xf32>
    %c2_i32_6 = arith.constant 2 : i32
    %18 = vector.broadcast %c2_i32_6 : i32 to vector<1x128xi32>
    %19 = arith.andi %4, %18 : vector<1x128xi32>
    %c0_i32_7 = arith.constant 0 : i32
    %20 = vector.broadcast %c0_i32_7 : i32 to vector<1x128xi32>
    %21 = arith.cmpi eq, %19, %20 : vector<1x128xi32>
    %22 = arith.select %21, %16, %17 : vector<1x128xi1>, vector<1x128xf32>
    %23 = arith.maximumf %15, %22 : vector<1x128xf32>
    %24 = arith.subf %0, %23 : vector<1x128xf32>
    %25 = math.exp %24 : vector<1x128xf32>
    %c127_i32_8 = arith.constant 127 : i32
    %26 = tpu.dynamic_rotate %25 by %c127_i32_8 dim 1 : vector<1x128xf32>, i32 -> vector<1x128xf32>
    %c1_i32_9 = arith.constant 1 : i32
    %27 = tpu.dynamic_rotate %25 by %c1_i32_9 dim 1 : vector<1x128xf32>, i32 -> vector<1x128xf32>
    %c1_i32_10 = arith.constant 1 : i32
    %28 = vector.broadcast %c1_i32_10 : i32 to vector<1x128xi32>
    %29 = arith.andi %4, %28 : vector<1x128xi32>
    %c0_i32_11 = arith.constant 0 : i32
    %30 = vector.broadcast %c0_i32_11 : i32 to vector<1x128xi32>
    %31 = arith.cmpi eq, %29, %30 : vector<1x128xi32>
    %32 = arith.select %31, %26, %27 : vector<1x128xi1>, vector<1x128xf32>
    %33 = arith.addf %25, %32 : vector<1x128xf32>
    %c126_i32_12 = arith.constant 126 : i32
    %34 = tpu.dynamic_rotate %33 by %c126_i32_12 dim 1 : vector<1x128xf32>, i32 -> vector<1x128xf32>
    %c2_i32_13 = arith.constant 2 : i32
    %35 = tpu.dynamic_rotate %33 by %c2_i32_13 dim 1 : vector<1x128xf32>, i32 -> vector<1x128xf32>
    %c2_i32_14 = arith.constant 2 : i32
    %36 = vector.broadcast %c2_i32_14 : i32 to vector<1x128xi32>
    %37 = arith.andi %4, %36 : vector<1x128xi32>
    %c0_i32_15 = arith.constant 0 : i32
    %38 = vector.broadcast %c0_i32_15 : i32 to vector<1x128xi32>
    %39 = arith.cmpi eq, %37, %38 : vector<1x128xi32>
    %40 = arith.select %39, %34, %35 : vector<1x128xi1>, vector<1x128xf32>
    %41 = arith.addf %33, %40 : vector<1x128xf32>
    %42 = math.log %41 : vector<1x128xf32>
    %43 = arith.subf %0, %23 : vector<1x128xf32>
    %44 = arith.subf %42, %43 : vector<1x128xf32>
    %45 = arith.divf %25, %41 : vector<1x128xf32>
    %cst = arith.constant 1.000000e+00 : f32
    %46 = vector.broadcast %cst : f32 to vector<1x128xf32>
    %47 = arith.subf %46, %45 : vector<1x128xf32>
    %cst_16 = arith.constant 0.000000e+00 : f32
    %48 = vector.broadcast %cst_16 : f32 to vector<1x128xf32>
    %49 = arith.maximumf %47, %48 : vector<1x128xf32>
    %cst_17 = arith.constant 1.000000e+00 : f32
    %50 = vector.broadcast %cst_17 : f32 to vector<1x128xf32>
    %51 = arith.mulf %50, %49 : vector<1x128xf32>
    %52 = arith.mulf %51, %49 : vector<1x128xf32>
    %53 = arith.mulf %3, %52 : vector<1x128xf32>
    %54 = arith.mulf %53, %44 : vector<1x128xf32>
    %c1_i32_18 = arith.constant 1 : i32
    %55 = arith.muli %arg0, %c1_i32_18 : i32
    %56 = tpu.iota {dimensions = array<i32: 0>} : vector<1x1xi32>
    %57 = vector.broadcast %55 : i32 to vector<1x1xi32>
    %58 = arith.addi %57, %56 : vector<1x1xi32>
    %c1_i32_19 = arith.constant 1 : i32
    %59 = vector.broadcast %c1_i32_19 : i32 to vector<1x1xi32>
    %60 = arith.cmpi slt, %58, %59 : vector<1x1xi32>
    %61 = vector.broadcast %60 : vector<1x1xi1> to vector<1x128xi1>
    %62 = arith.andi %7, %61 : vector<1x128xi1>
    %cst_20 = arith.constant 0.000000e+00 : f32
    %63 = vector.broadcast %cst_20 : f32 to vector<1x128xf32>
    %64 = arith.select %62, %54, %63 : vector<1x128xi1>, vector<1x128xf32>
    %65 = vector.shape_cast %64 : vector<1x128xf32> to vector<1x1x128xf32>
    %cst_21 = arith.constant dense<0.000000e+00> : vector<1xf32>
    %66 = vector.multi_reduction <add>, %65, %cst_21 [1, 2] : vector<1x1x128xf32> to vector<1xf32>
    %67 = vector.shape_cast %66 : vector<1xf32> to vector<1x1x1xf32>
    %68 = vector.extract %67[0, 0, 0] : f32 from vector<1x1x1xf32>
    %69 = vector.broadcast %68 : f32 to vector<1x1x128xf32>
    %c0_22 = arith.constant 0 : index
    %c0_23 = arith.constant 0 : index
    %c0_24 = arith.constant 0 : index
    %70 = vector.load %arg4[%c0_22, %c0_23, %c0_24] : memref<1x1x128xf32, #tpu.memory_space<vmem>>, vector<1x1x128xf32>
    tpu.vector_store %arg4[%c0_22, %c0_23, %c0_24], %69 {strides = array<i32>} : memref<1x1x128xf32, #tpu.memory_space<vmem>>, vector<1x1x128xf32>,
    return
  }
  func.func @transform_0(%arg0: i32) -> (i32, i32) {
    %c0_i32 = arith.constant 0 : i32
    %c0_i32_0 = arith.constant 0 : i32
    return %arg0, %c0_i32 : i32, i32
  }
  func.func @transform_1(%arg0: i32) -> (i32, i32) {
    %c0_i32 = arith.constant 0 : i32
    %c0_i32_0 = arith.constant 0 : i32
    return %arg0, %c0_i32 : i32, i32
  }
  func.func @transform_2(%arg0: i32) -> (i32, i32) {
    %c0_i32 = arith.constant 0 : i32
    %c0_i32_0 = arith.constant 0 : i32
    %c0_i32_1 = arith.constant 0 : i32
    return %c0_i32, %c0_i32_0 : i32, i32
  }
  func.func @transform_3(%arg0: i32) -> (i32, i32, i32) {
    %c0_i32 = arith.constant 0 : i32
    %c0_i32_0 = arith.constant 0 : i32
    %c0_i32_1 = arith.constant 0 : i32
    return %arg0, %c0_i32, %c0_i32_0 : i32, i32, i32
  }
}

</mosaic_0001>

<llo_original>
// kernel: tpu_custom_call.1
$region0: #{tpu_custom_call.1}
  #allocation0 [shape = 'u32[]', space=smem, size = 0x4, offset = 0x4, fixed_abs, tag = 'smem constant byte address 0x4 - core index']
  #allocation1 [shape = 'u32[144,128]{1,0:T(1,128)}', space=vmem, size = 0x12000, scoped, tag = 'internal scratch']
  %s0 = inlined_call_operand.hbm [shape: f32[1,128], index: 0, kind: input, shape index: {}]
  %s1 = inlined_call_operand.vmem [shape: s8[1,128], index: 1, kind: input, shape index: {}]
  %s2 = inlined_call_operand.vmem [shape: f32[1,128], index: 2, kind: input, shape index: {}]
  %s3 = inlined_call_operand.hbm [shape: f32[1,1,128], index: 3, kind: output, shape index: {}]
  %s4 = sld [smem:[#allocation0]]
  $region26: #{tpu_custom_call.1} parent=0
    _
  %s6 = ssub.s32 1, %s4
  %s7 = scalar_select 0, %s6, %s4
  $region1: #{tpu_custom_call.1} parent=0
    #allocation2 [shape = 'u8[512]{0}', space=vmem, size = 0x400, scoped, tag = 'input window, operand 0, single buffered']
    #allocation3 [shape = 's32[1]{0}', space=sflag, size = 0x4, scoped, tag = 'scoped memory for tpu_custom_call.1']
    #allocation4 [shape = 's32[1]{0}', space=sflag, size = 0x4, scoped, tag = 'scoped memory for tpu_custom_call.1']
    #allocation5 [shape = 'u8[512]{0}', space=vmem, size = 0x400, scoped, tag = 'output window, operand 0, single buffered']
    %8 = vsyncpa [#allocation3], 0
    %9 = vsyncpa [#allocation4], 0
    // Predicated region
    $region2: #{tpu_custom_call.1} parent=1 // pred_check
      _
    $region3: #{tpu_custom_call.1} parent=1 // pred_check_branch
      %11 = sbr.rel (0) target = $region5
    $region4: #{tpu_custom_call.1} parent=1 // pred_region
      %s13 = ssub.s32 16, 16
      %14 = vsyncadd [#allocation3], %s13
      %s16 = sshll.u32 [#allocation2], 4
      %s17 = int_to_ptr.vmem [resolvable:$true] %s16
      %19 = dma.hbm_to_vmem [thread:$0]  %s0, 16, %s17, [#allocation3]
    $region5: #{tpu_custom_call.1} parent=1 // pred_fallthru
      _
    // Predicated region
    $region6: #{tpu_custom_call.1} parent=1 // pred_check
      _
    $region7: #{tpu_custom_call.1} parent=1 // pred_check_branch
      %21 = sbr.rel (0) target = $region9
    $region8: #{tpu_custom_call.1} parent=1 // pred_region
      _
    $region9: #{tpu_custom_call.1} parent=1 // pred_fallthru
      _
    // Predicated region
    $region10: #{tpu_custom_call.1} parent=1 // pred_check
      _
    $region11: #{tpu_custom_call.1} parent=1 // pred_check_branch
      %23 = sbr.rel (0) target = $region13
    $region12: #{tpu_custom_call.1} parent=1 // pred_region
      _
    $region13: #{tpu_custom_call.1} parent=1 // pred_fallthru
      _
    // Predicated region
    $region14: #{tpu_custom_call.1} parent=1 // pred_check
      _
    $region15: #{tpu_custom_call.1} parent=1 // pred_check_branch
      %25 = sbr.rel (0) target = $region17
    $region16: #{tpu_custom_call.1} parent=1 // pred_region
      %26 = dma.done [#allocation3], 16
    $region17: #{tpu_custom_call.1} parent=1 // pred_fallthru
      _
    %v27 = vld [vmem:[#allocation2] sm:$0x1]
    %v28 = vld [vmem:[%s1] sm:$0x1]
    %v29 = vunpack.c.0.s8 %v28
    %v30 = vld [vmem:[%s2] sm:$0x1]
    %v31 = vlaneseq
    %v32 = vand.u32 %v31, 127
    %v33 = vand.u32 %v32, 3
    %vm34 = vcmp.eq.s32.totalorder %v29, %v33
    %35 = vrot.lane.b32.xlu0 %v27, 127
    %v36 = vpop.permute.xlu0 %35
    %37 = vrot.lane.b32.xlu0 %v27, 1
    %v38 = vpop.permute.xlu0 %37
    %v39 = vand.u32 %v32, 1
    %vm40 = vcmp.eq.s32.totalorder %v39, 0
    %v41 = vsel %vm40, %v36, %v38
    %v42 = vmax.f32 %v27, %v41
    %43 = vrot.lane.b32.xlu0 %v42, 126
    %v44 = vpop.permute.xlu0 %43
    %45 = vrot.lane.b32.xlu0 %v42, 2
    %v46 = vpop.permute.xlu0 %45
    %v47 = vand.u32 %v32, 2
    %vm48 = vcmp.eq.s32.totalorder %v47, 0
    %v49 = vsel %vm48, %v44, %v46
    %v50 = vmax.f32 %v42, %v49
    %v51 = vsub.f32 %v27, %v50
    %v52 = vmul.f32 %v51, 1.442695
    %v53 = vpow.pop %v52
    %54 = vrot.lane.b32.xlu0 %v53, 127
    %v55 = vpop.permute.xlu0 %54
    %56 = vrot.lane.b32.xlu0 %v53, 1
    %v57 = vpop.permute.xlu0 %56
    %v58 = vsel %vm40, %v55, %v57
    %v59 = vadd.f32 %v53, %v58
    %60 = vrot.lane.b32.xlu0 %v59, 126
    %v61 = vpop.permute.xlu0 %60
    %62 = vrot.lane.b32.xlu0 %v59, 2
    %v63 = vpop.permute.xlu0 %62
    %v64 = vsel %vm48, %v61, %v63
    %v65 = vadd.f32 %v59, %v64
    %v66 = vlog2.pop %v65
    %v67 = vmul.f32 %v66, 0.6931472
    %v68 = vsub.f32 %v67, %v51
    %v69 = vrcp.pop %v65
    %v70 = vmul.f32 %v53, %v69
    %v71 = vsub.f32 1.0, %v70
    %v72 = vmax.f32 %v71, 0.0
    %v73 = vmul.f32 %v72, %v72
    %v74 = vmul.f32 %v30, %v73
    %v75 = vmul.f32 %v74, %v68
    %v76 = vlaneseq
    %v77 = vshrl.u32 %v76, 7
    %v78 = vstv 0
    %v79 = vadd.s32 %v78, %v77
    %vm80 = vcmp.lt.s32.totalorder %v79, 1
    %v81 = vsel %vm80, 1, 0
    %vm82 = vcmp.eq.s32.totalorder %v81, 1
    %vm83 = vmand %vm34, %vm82
    %v84 = vsel %vm83, %v75, 0.0
    %vm85 = vcmask 1040384
    %v86 = vsel %vm85, %v84, 0.0
    %87 = vadd.xlane.f32.xlu0 %v86
    %v88 = vpop.xlane.xlu0 %87
    %v89 = vrot.slane %v88, 4
    %v90 = vadd.f32 %v88, %v89
    %v91 = vrot.slane %v90, 2
    %v92 = vadd.f32 %v90, %v91
    %v93 = vrot.slane %v92, 1
    %v94 = vadd.f32 %v92, %v93
    %s95 = vtos %v94
    %v96 = vstv %s95
    %97 = vst [vmem:[#allocation5] sm:$0x1] %v96
    // Predicated region
    $region18: #{tpu_custom_call.1} parent=1 // pred_check
      _
    $region19: #{tpu_custom_call.1} parent=1 // pred_check_branch
      %99 = sbr.rel (0) target = $region21
    $region20: #{tpu_custom_call.1} parent=1 // pred_region
      %s101 = ssub.s32 16, 16
      %102 = vsyncadd [#allocation4], %s101
      %s104 = sshll.u32 [#allocation5], 4
      %s105 = int_to_ptr.vmem [resolvable:$true] %s104
      %107 = dma.vmem_to_hbm [thread:$0]  %s105, 16, %s3, [#allocation4]
    $region21: #{tpu_custom_call.1} parent=1 // pred_fallthru
      _
    // Predicated region
    $region22: #{tpu_custom_call.1} parent=1 // pred_check
      _
    $region23: #{tpu_custom_call.1} parent=1 // pred_check_branch
      %109 = sbr.rel (0) target = $region25
    $region24: #{tpu_custom_call.1} parent=1 // pred_region
      %110 = dma.done [#allocation4], 16
    $region25: #{tpu_custom_call.1} parent=1 // pred_fallthru
      _
    %111 = vsyncpa [#allocation3], 1
    %112 = vsyncpa [#allocation4], 1

</llo_original>
